<compile_context>
chip_gen: v7x
topology: tpu7x:2x2x1
jax: 0.10.0
libtpu: 0.0.40
codegen_flags: <defaults>
</compile_context>

<pallas_src>
import jax
import jax.numpy as jnp
from jax import lax
from jax.experimental import pallas as pl
from jax.experimental.pallas import tpu as pltpu


def _round_up(x, m):
    return ((x + m - 1) // m) * m


def _normalize_concat_kernel(outputs_ref, idx_ref, table_ref, o_ref):
    """L2-normalize `outputs` rows; gather pre-normalized embedding rows via a
    one-hot matmul (idle MXU); write both halves with two direct stores."""
    x = outputs_ref[...].astype(jnp.float32)                  # (TB, H)
    h = x.shape[1]

    # F.normalize eps semantics: x / max(||x||, 1e-12) == x * rsqrt(max(||x||^2, 1e-24))
    inv = lax.rsqrt(jnp.maximum(jnp.sum(x * x, axis=1, keepdims=True), 1e-24))
    xn = x * inv

    # In-kernel embedding gather: one-hot (TB, NR) @ table (NR, E).
    # HIGHEST precision keeps the 0/1-matmul effectively exact in f32.
    idx = idx_ref[...]                                          # (TB, 1) int32
    nr = table_ref.shape[0]
    iota = lax.broadcasted_iota(jnp.int32, (idx.shape[0], nr), 1)
    onehot = (idx == iota).astype(jnp.float32)                  # (TB, NR)
    emb = jnp.dot(onehot, table_ref[...],
                  precision=lax.Precision.HIGHEST,
                  preferred_element_type=jnp.float32)           # (TB, E)

    # Two direct stores (no in-register concat / lane shift).
    o_ref[:, :h] = xn.astype(o_ref.dtype)
    o_ref[:, h:] = emb.astype(o_ref.dtype)


def crowd_embedding_concat(outputs, embedding_weight, n_annotators,
                           annotators=None, *, tile_rows=None):
    """JAX/Pallas equivalent of CrowdEmbeddingConcatModule.forward (eval mode).

    outputs:          (B, H) float array
    embedding_weight: (n_annotators + 1, E) float array
    annotators:       optional (B,) int array of annotator ids
    tile_rows:        optional batch-tile override (testing / tuning)
    returns:          (B, H + E) float array
    """
    B, H = outputs.shape
    E = embedding_weight.shape[1]
    out_dtype = outputs.dtype

    # --- Hoisted once-per-call work (tiny, plain JAX) -------------------------
    # Normalize the (n_annotators+1, E) table ONCE in f32 (gather-then-normalize
    # == normalize-then-gather row-wise); zero-pad rows to a sublane multiple so
    # the MXU operand is clean.  Padded rows are never selected by valid indices.
    w = embedding_weight.astype(jnp.float32)
    w_inv = lax.rsqrt(jnp.maximum(jnp.sum(w * w, axis=1, keepdims=True), 1e-24))
    w_normed = w * w_inv
    nr = _round_up(w_normed.shape[0], 8)
    if nr != w_normed.shape[0]:
        w_normed = jnp.pad(w_normed, ((0, nr - w_normed.shape[0]), (0, 0)))

    # TODO(synk): training-time annotator_dropout uses host-side numpy RNG with
    # in-place index mutation; eval-path semantics only.
    if annotators is None:
        idx = jnp.full((B, 1), n_annotators, dtype=jnp.int32)   # missing_index
    else:
        idx = annotators.astype(jnp.int32).reshape(B, 1)

    # --- Batch tiling ----------------------------------------------------------
    itemsize = jnp.dtype(out_dtype).itemsize
    sublane = max(8, 32 // max(itemsize, 1))            # f32: 8, bf16: 16, int8: 32
    bytes_per_row = (H * outputs.dtype.itemsize          # outputs read
                     + 4                                  # idx read
                     + (H + E) * itemsize)                # output write

    # ~4 MiB of HBM traffic per grid step amortizes the ~0.35 us per-step cost;
    # keep the double-buffered VMEM footprint well under the 32 MiB scoped budget
    # (v7x: 64 MiB physical / 32 MiB scoped; v5e scoped limit raised below).
    rows_target = max(sublane, ((4 << 20) // bytes_per_row) // sublane * sublane)
    rows_vmem = max(sublane, ((20 << 20) // (2 * bytes_per_row)) // sublane * sublane)
    tb = min(rows_target, rows_vmem, 32768)

    rows_total = _round_up(B, sublane)
    tb = min(tb, rows_total)
    # Keep >= 2 grid steps when there is enough work so both v7x TensorCores
    # participate in the "parallel" batch axis.
    if rows_total >= 2 * 2048:
        tb = min(tb, _round_up((rows_total + 1) // 2, sublane))
    if tile_rows is not None:
        tb = min(tile_rows, rows_total)
    tb = max(sublane, _round_up(tb, sublane))

    grid = (pl.cdiv(B, tb),)   # ragged batches: partial last block, no jnp.pad copy

    out = pl.pallas_call(
        _normalize_concat_kernel,
        out_shape=jax.ShapeDtypeStruct((B, H + E), out_dtype),
        grid_spec=pl.GridSpec(
            grid=grid,
            in_specs=[
                pl.BlockSpec((tb, H), lambda i: (i, 0)),
                pl.BlockSpec((tb, 1), lambda i: (i, 0)),
                pl.BlockSpec((nr, E), lambda i: (0, 0)),   # constant tiny table
            ],
            out_specs=pl.BlockSpec((tb, H + E), lambda i: (i, 0)),
        ),
        compiler_params=pltpu.CompilerParams(
            dimension_semantics=("parallel",),
            vmem_limit_bytes=32 * 1024 * 1024,
        ),
    )(outputs, idx, w_normed)
    return out


def _reference(outputs, embedding_weight, n_annotators, annotators=None):
    """Pure-JAX reference of the PyTorch forward for verification."""
    B = outputs.shape[0]
    if annotators is None:
        idx = jnp.full((B,), n_annotators, dtype=jnp.int32)
    else:
        idx = annotators.astype(jnp.int32)
    embedded = jnp.take(embedding_weight, idx, axis=0)

    def l2norm(x):
        n = jnp.maximum(jnp.linalg.norm(x, axis=1, keepdims=True), 1e-12)
        return x / n

    return jnp.concatenate([l2norm(outputs), l2norm(embedded)], axis=1)


if __name__ == "__main__":
    # Module hyper-parameters (deterministic, synthetic init).
    n_annotators = 10
    annotator_embedding_dim = 16   # E
    batch = 8                      # B
    hidden = 32                    # H

    key = jax.random.PRNGKey(0)
    k_emb, k_out, k_ann = jax.random.split(key, 3)

    embedding_weight = jax.random.normal(
        k_emb, (n_annotators + 1, annotator_embedding_dim), dtype=jnp.float32)
    outputs = jax.random.normal(k_out, (batch, hidden), dtype=jnp.float32)
    annotators = jax.random.randint(k_ann, (batch,), 0, n_annotators, dtype=jnp.int32)

    # Case 1: annotators provided.
    got = jax.block_until_ready(
        crowd_embedding_concat(outputs, embedding_weight, n_annotators, annotators))
    want = _reference(outputs, embedding_weight, n_annotators, annotators)
    assert got.shape == (batch, hidden + annotator_embedding_dim)
    assert jnp.allclose(got, want, atol=1e-5, rtol=1e-5)

    # Case 2: annotators=None -> missing-index embedding repeated over the batch.
    got_none = jax.block_until_ready(
        crowd_embedding_concat(outputs, embedding_weight, n_annotators, None))
    want_none = _reference(outputs, embedding_weight, n_annotators, None)
    assert jnp.allclose(got_none, want_none, atol=1e-5, rtol=1e-5)

    # Case 3: ragged batch (not a sublane multiple) -> masked partial last block,
    # no jnp.pad copy of the inputs.
    B3 = 13
    out3 = jax.random.normal(jax.random.PRNGKey(1), (B3, hidden), dtype=jnp.float32)
    ann3 = jax.random.randint(jax.random.PRNGKey(2), (B3,), 0, n_annotators, dtype=jnp.int32)
    got3 = jax.block_until_ready(
        crowd_embedding_concat(out3, embedding_weight, n_annotators, ann3))
    want3 = _reference(out3, embedding_weight, n_annotators, ann3)
    assert got3.shape == (B3, hidden + annotator_embedding_dim)
    assert jnp.allclose(got3, want3, atol=1e-5, rtol=1e-5)

    # Case 4: multi-step grid with a partial last block (small tile override).
    B4 = 50
    out4 = jax.random.normal(jax.random.PRNGKey(3), (B4, hidden), dtype=jnp.float32)
    ann4 = jax.random.randint(jax.random.PRNGKey(4), (B4,), 0, n_annotators, dtype=jnp.int32)
    got4 = jax.block_until_ready(
        crowd_embedding_concat(out4, embedding_weight, n_annotators, ann4, tile_rows=16))
    want4 = _reference(out4, embedding_weight, n_annotators, ann4)
    assert got4.shape == (B4, hidden + annotator_embedding_dim)
    assert jnp.allclose(got4, want4, atol=1e-5, rtol=1e-5)

    print("KERNEL_OK")
</pallas_src>

<mosaic_0001>
module attributes {stable_mosaic.version = 11 : i64} {
  func.func @_normalize_concat_kernel(%arg0: i32, %arg1: memref<8x32xf32, #tpu.memory_space<vmem>>, %arg2: memref<8x1xi32, #tpu.memory_space<vmem>>, %arg3: memref<16x16xf32, #tpu.memory_space<vmem>>, %arg4: memref<8x48xf32, #tpu.memory_space<vmem>>) attributes {dimension_semantics = [#tpu.dimension_semantics<parallel>], iteration_bounds = array<i64: 1>, scalar_prefetch = 0 : i64, scratch_operands = 0 : i64, tpu.core_type = #tpu.core_type<tc>, window_params = [{transform_indices = @transform_0, window_bounds = array<i64: 8, 32>}, {transform_indices = @transform_1, window_bounds = array<i64: 8, 1>}, {pipeline_mode = #tpu.pipeline_mode<synchronous>, transform_indices = @transform_2, window_bounds = array<i64: 16, 16>}, {transform_indices = @transform_3, window_bounds = array<i64: 8, 48>}]} {
    %c0 = arith.constant 0 : index
    %c0_0 = arith.constant 0 : index
    %0 = vector.load %arg1[%c0, %c0_0] : memref<8x32xf32, #tpu.memory_space<vmem>>, vector<8x32xf32>
    %1 = arith.mulf %0, %0 : vector<8x32xf32>
    %cst = arith.constant dense<0.000000e+00> : vector<8xf32>
    %2 = vector.multi_reduction <add>, %1, %cst [1] : vector<8x32xf32> to vector<8xf32>
    %3 = vector.shape_cast %2 : vector<8xf32> to vector<8x1xf32>
    %cst_1 = arith.constant 1.000000e-24 : f32
    %4 = vector.broadcast %cst_1 : f32 to vector<8x1xf32>
    %5 = arith.maximumf %3, %4 : vector<8x1xf32>
    %6 = math.rsqrt %5 : vector<8x1xf32>
    %7 = vector.broadcast %6 : vector<8x1xf32> to vector<8x32xf32>
    %8 = arith.mulf %0, %7 : vector<8x32xf32>
    %c0_2 = arith.constant 0 : index
    %c0_3 = arith.constant 0 : index
    %9 = vector.load %arg2[%c0_2, %c0_3] : memref<8x1xi32, #tpu.memory_space<vmem>>, vector<8x1xi32>
    %10 = tpu.iota {dimensions = array<i32: 1>} : vector<8x16xi32>
    %11 = vector.broadcast %9 : vector<8x1xi32> to vector<8x16xi32>
    %12 = arith.cmpi eq, %11, %10 : vector<8x16xi32>
    %13 = arith.extui %12 : vector<8x16xi1> to vector<8x16xi32>
    %14 = arith.sitofp %13 : vector<8x16xi32> to vector<8x16xf32>
    %c0_4 = arith.constant 0 : index
    %c0_5 = arith.constant 0 : index
    %15 = vector.load %arg3[%c0_4, %c0_5] : memref<16x16xf32, #tpu.memory_space<vmem>>, vector<16x16xf32>
    %cst_6 = arith.constant dense<0.000000e+00> : vector<8x16xf32>
    %16 = tpu.matmul %14, %15, %cst_6 {dimension_numbers = #tpu.dot_dimension_numbers<[1], [0], [0], [1], [0, 0, 1, 1], [], []>, precision = #tpu.contract_precision<fp32>} : vector<8x16xf32>, vector<16x16xf32>, vector<8x16xf32> -> vector<8x16xf32>
    %c0_7 = arith.constant 0 : index
    %c0_8 = arith.constant 0 : index
    %17 = vector.load %arg4[%c0_7, %c0_8] : memref<8x48xf32, #tpu.memory_space<vmem>>, vector<8x32xf32>
    tpu.vector_store %arg4[%c0_7, %c0_8], %8 {strides = array<i32>} : memref<8x48xf32, #tpu.memory_space<vmem>>, vector<8x32xf32>,
    %c0_9 = arith.constant 0 : index
    %c32 = arith.constant 32 : index
    %18 = vector.load %arg4[%c0_9, %c32] : memref<8x48xf32, #tpu.memory_space<vmem>>, vector<8x16xf32>
    tpu.vector_store %arg4[%c0_9, %c32], %16 {strides = array<i32>} : memref<8x48xf32, #tpu.memory_space<vmem>>, vector<8x16xf32>,
    return
  }
  func.func @transform_0(%arg0: i32) -> (i32, i32) {
    %c0_i32 = arith.constant 0 : i32
    %c0_i32_0 = arith.constant 0 : i32
    return %arg0, %c0_i32 : i32, i32
  }
  func.func @transform_1(%arg0: i32) -> (i32, i32) {
    %c0_i32 = arith.constant 0 : i32
    %c0_i32_0 = arith.constant 0 : i32
    return %arg0, %c0_i32 : i32, i32
  }
  func.func @transform_2(%arg0: i32) -> (i32, i32) {
    %c0_i32 = arith.constant 0 : i32
    %c0_i32_0 = arith.constant 0 : i32
    %c0_i32_1 = arith.constant 0 : i32
    return %c0_i32, %c0_i32_0 : i32, i32
  }
  func.func @transform_3(%arg0: i32) -> (i32, i32) {
    %c0_i32 = arith.constant 0 : i32
    %c0_i32_0 = arith.constant 0 : i32
    return %arg0, %c0_i32 : i32, i32
  }
}

</mosaic_0001>

<llo_original>
// kernel: tpu_custom_call.1
$region0: #{tpu_custom_call.1}
  #allocation0 [shape = 'u32[]', space=smem, size = 0x4, offset = 0x4, fixed_abs, tag = 'smem constant byte address 0x4 - core index']
  #allocation1 [shape = 'u32[144,128]{1,0:T(1,128)}', space=vmem, size = 0x12000, scoped, tag = 'internal scratch']
  %s0 = inlined_call_operand.hbm [shape: f32[8,32], index: 0, kind: input, shape index: {}]
  %s1 = inlined_call_operand.vmem [shape: s32[8,1], index: 1, kind: input, shape index: {}]
  %s2 = inlined_call_operand.vmem [shape: f32[16,16], index: 2, kind: input, shape index: {}]
  %s3 = inlined_call_operand.hbm [shape: f32[8,48], index: 3, kind: output, shape index: {}]
  %s4 = sld [smem:[#allocation0]]
  $region26: #{tpu_custom_call.1} parent=0
    _
  %s6 = ssub.s32 1, %s4
  %s7 = scalar_select 0, %s6, %s4
  $region1: #{tpu_custom_call.1} parent=0
    #allocation2 [shape = 'u8[4096]{0}', space=vmem, size = 0x1000, scoped, tag = 'input window, operand 0, single buffered']
    #allocation3 [shape = 's32[1]{0}', space=sflag, size = 0x4, scoped, tag = 'scoped memory for tpu_custom_call.1']
    #allocation4 [shape = 's32[1]{0}', space=sflag, size = 0x4, scoped, tag = 'scoped memory for tpu_custom_call.1']
    #allocation5 [shape = 'u8[4096]{0}', space=vmem, size = 0x1000, scoped, tag = 'output window, operand 0, single buffered']
    %8 = vsyncpa [#allocation3], 0
    %9 = vsyncpa [#allocation4], 0
    // Predicated region
    $region2: #{tpu_custom_call.1} parent=1 // pred_check
      _
    $region3: #{tpu_custom_call.1} parent=1 // pred_check_branch
      %11 = sbr.rel (0) target = $region5
    $region4: #{tpu_custom_call.1} parent=1 // pred_region
      %s13 = ssub.s32 128, 128
      %14 = vsyncadd [#allocation3], %s13
      %s16 = sshll.u32 [#allocation2], 4
      %s17 = int_to_ptr.vmem [resolvable:$true] %s16
      %19 = dma.hbm_to_vmem [thread:$0]  %s0, 128, %s17, [#allocation3]
    $region5: #{tpu_custom_call.1} parent=1 // pred_fallthru
      _
    // Predicated region
    $region6: #{tpu_custom_call.1} parent=1 // pred_check
      _
    $region7: #{tpu_custom_call.1} parent=1 // pred_check_branch
      %21 = sbr.rel (0) target = $region9
    $region8: #{tpu_custom_call.1} parent=1 // pred_region
      _
    $region9: #{tpu_custom_call.1} parent=1 // pred_fallthru
      _
    // Predicated region
    $region10: #{tpu_custom_call.1} parent=1 // pred_check
      _
    $region11: #{tpu_custom_call.1} parent=1 // pred_check_branch
      %23 = sbr.rel (0) target = $region13
    $region12: #{tpu_custom_call.1} parent=1 // pred_region
      _
    $region13: #{tpu_custom_call.1} parent=1 // pred_fallthru
      _
    // Predicated region
    $region14: #{tpu_custom_call.1} parent=1 // pred_check
      _
    $region15: #{tpu_custom_call.1} parent=1 // pred_check_branch
      %25 = sbr.rel (0) target = $region17
    $region16: #{tpu_custom_call.1} parent=1 // pred_region
      %26 = dma.done [#allocation3], 128
    $region17: #{tpu_custom_call.1} parent=1 // pred_fallthru
      _
    %v27 = vld [vmem:[#allocation2] sm:$0xff]
    %v28 = vmul.f32 %v27, %v27
    %vm29 = vcmask 261120
    %v30 = vsel %vm29, %v28, 0.0
    %31 = vadd.xlane.f32.xlu0 %v30
    %v32 = vpop.xlane.xlu0 %31
    %v33 = vmax.f32 %v32, 1e-24
    %v34 = vrsqrt.pop %v33
    %v35 = vmul.f32 %v27, %v34
    %v36 = vld [vmem:[%s1] sm:$0xff]
    %v37 = vlaneseq
    %v38 = vand.u32 %v37, 127
    %39 = vset.pattern.permute.xlu0 0
    %40 = vperm.xlu0 %39, %v36
    %v41 = vpop.permute.xlu0 %40
    %vm42 = vcmp.eq.s32.totalorder %v41, %v38
    %v43 = vsel %vm42, 1, 0
    %v44 = vcvt.s32.f32 %v43
    %v45 = vld [vmem:[%s2] sm:$0xff]
    %v46 = vld [vmem:[%s2 + $0x8] sm:$0xff]
    %vm47 = vcmask 130048
    %v49 = vsel %vm47, %v44, 0
    %51 = vmatprep.subr.mxu0 0.0
    %v52 = vand.u32 %v45, 4294901760
    %53 = vmatpush1.msra.mxu0 %v52
    %54 = vmatprep.subr.mxu0 0.0
    %v55 = vand.u32 %v46, 4294901760
    %56 = vmatpush1.msra.mxu0 %v55
    %57 = vmatprep.subr.mxu0 0.0
    %58 = vmatpush1.msra.mxu0 0.0
    %59 = vmatprep.subr.mxu0 0.0
    %60 = vmatpush1.msra.mxu0 0.0
    %61 = vmatprep.subr.mxu0 0.0
    %62 = vmatpush1.msra.mxu0 0.0
    %63 = vmatprep.subr.mxu0 0.0
    %64 = vmatpush1.msra.mxu0 0.0
    %65 = vmatprep.subr.mxu0 0.0
    %66 = vmatpush1.msra.mxu0 0.0
    %67 = vmatprep.subr.mxu0 0.0
    %68 = vmatpush1.msra.mxu0 0.0
    %69 = vmatprep.subr.mxu0 0.0
    %70 = vmatpush1.msra.mxu0 0.0
    %71 = vmatprep.subr.mxu0 0.0
    %72 = vmatpush1.msra.mxu0 0.0
    %73 = vmatprep.subr.mxu0 0.0
    %74 = vmatpush1.msra.mxu0 0.0
    %75 = vmatprep.subr.mxu0 0.0
    %76 = vmatpush1.msra.mxu0 0.0
    %77 = vmatprep.subr.mxu0 0.0
    %78 = vmatpush1.msra.mxu0 0.0
    %79 = vmatprep.subr.mxu0 0.0
    %80 = vmatpush1.msra.mxu0 0.0
    %81 = vmatprep.subr.mxu0 0.0
    %82 = vmatpush1.msra.mxu0 0.0
    %83 = vmatprep.subr.mxu0 0.0
    %84 = vmatpush1.msra.mxu0 0.0
    %85 = vmatprep.subr.mxu0 0.0
    %86 = vmatpush1.msra.mxu0 0.0
    %87 = vmatprep.subr.mxu0 0.0
    %88 = vmatpush1.msra.mxu0 0.0
    %89 = vmatprep.subr.mxu0 0.0
    %90 = vmatpush1.msra.mxu0 0.0
    %91 = vmatprep.subr.mxu0 0.0
    %92 = vmatpush1.msra.mxu0 0.0
    %93 = vmatprep.subr.mxu0 0.0
    %94 = vmatpush1.msra.mxu0 0.0
    %95 = vmatprep.subr.mxu0 0.0
    %96 = vmatpush1.msra.mxu0 0.0
    %97 = vmatprep.subr.mxu0 0.0
    %98 = vmatpush1.msra.mxu0 0.0
    %99 = vmatprep.subr.mxu0 0.0
    %100 = vmatpush1.msra.mxu0 0.0
    %101 = vmatprep.subr.mxu0 0.0
    %102 = vmatpush1.msra.mxu0 0.0
    %103 = vmatprep.subr.mxu0 0.0
    %104 = vmatpush1.msra.mxu0 0.0
    %105 = vmatprep.subr.mxu0 0.0
    %106 = vmatpush1.msra.mxu0 0.0
    %107 = vmatprep.subr.mxu0 0.0
    %108 = vmatpush1.msra.mxu0 0.0
    %109 = vmatprep.subr.mxu0 0.0
    %110 = vmatpush1.msra.mxu0 0.0
    %111 = vmatprep.subr.mxu0 0.0
    %112 = vmatpush1.msra.mxu0 0.0
    %113 = vmatprep.subr.mxu0 0.0
    %114 = vmatpush1.msra.mxu0 0.0
    %115 = vmatprep.subr.mxu0 0.0
    %116 = vmatpush1.msra.mxu0 0.0
    %117 = vmatprep.mubr.f32.mxu0 0.0
    %v118 = vand.u32 %v49, 4294901760
    %v119 = vsub.f32 %v49, %v118
    %v120 = vand.u32 %v119, 4294901760
    %v121 = vsub.f32 %v119, %v120
    %v122 = vand.u32 %v121, 4294901760
    %123 = vmatmul.mubr.f32.gmra.mrb[0].mxu0 %v122
    %v124 = vpop.f32.mrb[0].mxu0
    %v125 = vadd.f32 0.0, %v124
    %v126 = vpop.f32.mrb[0].mxu0
    %127 = vdwg.mxu0
    %128 = vmatprep.subr.mxu0 0.0
    %v129 = vand.u32 %v45, 4294901760
    %v130 = vsub.f32 %v45, %v129
    %v131 = vand.u32 %v130, 4294901760
    %v132 = vsub.f32 %v130, %v131
    %v133 = vand.u32 %v132, 4294901760
    %134 = vmatpush1.msra.mxu0 %v133
    %135 = vmatprep.subr.mxu0 0.0
    %v136 = vand.u32 %v46, 4294901760
    %v137 = vsub.f32 %v46, %v136
    %v138 = vand.u32 %v137, 4294901760
    %v139 = vsub.f32 %v137, %v138
    %v140 = vand.u32 %v139, 4294901760
    %141 = vmatpush1.msra.mxu0 %v140
    %142 = vmatprep.subr.mxu0 0.0
    %143 = vmatpush1.msra.mxu0 0.0
    %144 = vmatprep.subr.mxu0 0.0
    %145 = vmatpush1.msra.mxu0 0.0
    %146 = vmatprep.subr.mxu0 0.0
    %147 = vmatpush1.msra.mxu0 0.0
    %148 = vmatprep.subr.mxu0 0.0
    %149 = vmatpush1.msra.mxu0 0.0
    %150 = vmatprep.subr.mxu0 0.0
    %151 = vmatpush1.msra.mxu0 0.0
    %152 = vmatprep.subr.mxu0 0.0
    %153 = vmatpush1.msra.mxu0 0.0
    %154 = vmatprep.subr.mxu0 0.0
    %155 = vmatpush1.msra.mxu0 0.0
    %156 = vmatprep.subr.mxu0 0.0
    %157 = vmatpush1.msra.mxu0 0.0
    %158 = vmatprep.subr.mxu0 0.0
    %159 = vmatpush1.msra.mxu0 0.0
    %160 = vmatprep.subr.mxu0 0.0
    %161 = vmatpush1.msra.mxu0 0.0
    %162 = vmatprep.subr.mxu0 0.0
    %163 = vmatpush1.msra.mxu0 0.0
    %164 = vmatprep.subr.mxu0 0.0
    %165 = vmatpush1.msra.mxu0 0.0
    %166 = vmatprep.subr.mxu0 0.0
    %167 = vmatpush1.msra.mxu0 0.0
    %168 = vmatprep.subr.mxu0 0.0
    %169 = vmatpush1.msra.mxu0 0.0
    %170 = vmatprep.subr.mxu0 0.0
    %171 = vmatpush1.msra.mxu0 0.0
    %172 = vmatprep.subr.mxu0 0.0
    %173 = vmatpush1.msra.mxu0 0.0
    %174 = vmatprep.subr.mxu0 0.0
    %175 = vmatpush1.msra.mxu0 0.0
    %176 = vmatprep.subr.mxu0 0.0
    %177 = vmatpush1.msra.mxu0 0.0
    %178 = vmatprep.subr.mxu0 0.0
    %179 = vmatpush1.msra.mxu0 0.0
    %180 = vmatprep.subr.mxu0 0.0
    %181 = vmatpush1.msra.mxu0 0.0
    %182 = vmatprep.subr.mxu0 0.0
    %183 = vmatpush1.msra.mxu0 0.0
    %184 = vmatprep.subr.mxu0 0.0
    %185 = vmatpush1.msra.mxu0 0.0
    %186 = vmatprep.subr.mxu0 0.0
    %187 = vmatpush1.msra.mxu0 0.0
    %188 = vmatprep.subr.mxu0 0.0
    %189 = vmatpush1.msra.mxu0 0.0
    %190 = vmatprep.subr.mxu0 0.0
    %191 = vmatpush1.msra.mxu0 0.0
    %192 = vmatprep.subr.mxu0 0.0
    %193 = vmatpush1.msra.mxu0 0.0
    %194 = vmatprep.subr.mxu0 0.0
    %195 = vmatpush1.msra.mxu0 0.0
    %196 = vmatprep.subr.mxu0 0.0
    %197 = vmatpush1.msra.mxu0 0.0
    %198 = vmatprep.subr.mxu0 0.0
    %199 = vmatpush1.msra.mxu0 0.0
    %200 = vmatprep.subr.mxu0 0.0
    %201 = vmatpush1.msra.mxu0 0.0
    %202 = vmatprep.mubr.f32.mxu0 0.0
    %v203 = vand.u32 %v49, 4294901760
    %204 = vmatmul.mubr.f32.gmra.mrb[0].mxu0 %v203
    %v205 = vpop.f32.mrb[0].mxu0
    %v206 = vadd.f32 %v125, %v205
    %v207 = vpop.f32.mrb[0].mxu0
    %208 = vdwg.mxu0
    %209 = vmatprep.subr.mxu0 0.0
    %v210 = vand.u32 %v45, 4294901760
    %v211 = vsub.f32 %v45, %v210
    %212 = vmatpush1.msra.mxu0 %v211
    %213 = vmatprep.subr.mxu0 0.0
    %v214 = vand.u32 %v46, 4294901760
    %v215 = vsub.f32 %v46, %v214
    %216 = vmatpush1.msra.mxu0 %v215
    %217 = vmatprep.subr.mxu0 0.0
    %218 = vmatpush1.msra.mxu0 0.0
    %219 = vmatprep.subr.mxu0 0.0
    %220 = vmatpush1.msra.mxu0 0.0
    %221 = vmatprep.subr.mxu0 0.0
    %222 = vmatpush1.msra.mxu0 0.0
    %223 = vmatprep.subr.mxu0 0.0
    %224 = vmatpush1.msra.mxu0 0.0
    %225 = vmatprep.subr.mxu0 0.0
    %226 = vmatpush1.msra.mxu0 0.0
    %227 = vmatprep.subr.mxu0 0.0
    %228 = vmatpush1.msra.mxu0 0.0
    %229 = vmatprep.subr.mxu0 0.0
    %230 = vmatpush1.msra.mxu0 0.0
    %231 = vmatprep.subr.mxu0 0.0
    %232 = vmatpush1.msra.mxu0 0.0
    %233 = vmatprep.subr.mxu0 0.0
    %234 = vmatpush1.msra.mxu0 0.0
    %235 = vmatprep.subr.mxu0 0.0
    %236 = vmatpush1.msra.mxu0 0.0
    %237 = vmatprep.subr.mxu0 0.0
    %238 = vmatpush1.msra.mxu0 0.0
    %239 = vmatprep.subr.mxu0 0.0
    %240 = vmatpush1.msra.mxu0 0.0
    %241 = vmatprep.subr.mxu0 0.0
    %242 = vmatpush1.msra.mxu0 0.0
    %243 = vmatprep.subr.mxu0 0.0
    %244 = vmatpush1.msra.mxu0 0.0
    %245 = vmatprep.subr.mxu0 0.0
    %246 = vmatpush1.msra.mxu0 0.0
    %247 = vmatprep.subr.mxu0 0.0
    %248 = vmatpush1.msra.mxu0 0.0
    %249 = vmatprep.subr.mxu0 0.0
    %250 = vmatpush1.msra.mxu0 0.0
    %251 = vmatprep.subr.mxu0 0.0
    %252 = vmatpush1.msra.mxu0 0.0
    %253 = vmatprep.subr.mxu0 0.0
    %254 = vmatpush1.msra.mxu0 0.0
    %255 = vmatprep.subr.mxu0 0.0
    %256 = vmatpush1.msra.mxu0 0.0
    %257 = vmatprep.subr.mxu0 0.0
    %258 = vmatpush1.msra.mxu0 0.0
    %259 = vmatprep.subr.mxu0 0.0
    %260 = vmatpush1.msra.mxu0 0.0
    %261 = vmatprep.subr.mxu0 0.0
    %262 = vmatpush1.msra.mxu0 0.0
    %263 = vmatprep.subr.mxu0 0.0
    %264 = vmatpush1.msra.mxu0 0.0
    %265 = vmatprep.subr.mxu0 0.0
    %266 = vmatpush1.msra.mxu0 0.0
    %267 = vmatprep.subr.mxu0 0.0
    %268 = vmatpush1.msra.mxu0 0.0
    %269 = vmatprep.subr.mxu0 0.0
    %270 = vmatpush1.msra.mxu0 0.0
    %271 = vmatprep.subr.mxu0 0.0
    %272 = vmatpush1.msra.mxu0 0.0
    %273 = vmatprep.subr.mxu0 0.0
    %274 = vmatpush1.msra.mxu0 0.0
    %275 = vmatprep.subr.mxu0 0.0
    %276 = vmatpush1.msra.mxu0 0.0
    %277 = vmatprep.mubr.f32.mxu0 0.0
    %v278 = vand.u32 %v49, 4294901760
    %v279 = vsub.f32 %v49, %v278
    %280 = vmatmul.mubr.f32.gmra.mrb[0].mxu0 %v279
    %v281 = vpop.f32.mrb[0].mxu0
    %v282 = vadd.f32 %v206, %v281
    %v283 = vpop.f32.mrb[0].mxu0
    %284 = vdwg.mxu0
    %285 = vmatprep.subr.mxu0 0.0
    %v286 = vand.u32 %v45, 4294901760
    %287 = vmatpush1.msra.mxu0 %v286
    %288 = vmatprep.subr.mxu0 0.0
    %v289 = vand.u32 %v46, 4294901760
    %290 = vmatpush1.msra.mxu0 %v289
    %291 = vmatprep.subr.mxu0 0.0
    %292 = vmatpush1.msra.mxu0 0.0
    %293 = vmatprep.subr.mxu0 0.0
    %294 = vmatpush1.msra.mxu0 0.0
    %295 = vmatprep.subr.mxu0 0.0
    %296 = vmatpush1.msra.mxu0 0.0
    %297 = vmatprep.subr.mxu0 0.0
    %298 = vmatpush1.msra.mxu0 0.0
    %299 = vmatprep.subr.mxu0 0.0
    %300 = vmatpush1.msra.mxu0 0.0
    %301 = vmatprep.subr.mxu0 0.0
    %302 = vmatpush1.msra.mxu0 0.0
    %303 = vmatprep.subr.mxu0 0.0
    %304 = vmatpush1.msra.mxu0 0.0
    %305 = vmatprep.subr.mxu0 0.0
    %306 = vmatpush1.msra.mxu0 0.0
    %307 = vmatprep.subr.mxu0 0.0
    %308 = vmatpush1.msra.mxu0 0.0
    %309 = vmatprep.subr.mxu0 0.0
    %310 = vmatpush1.msra.mxu0 0.0
    %311 = vmatprep.subr.mxu0 0.0
    %312 = vmatpush1.msra.mxu0 0.0
    %313 = vmatprep.subr.mxu0 0.0
    %314 = vmatpush1.msra.mxu0 0.0
    %315 = vmatprep.subr.mxu0 0.0
    %316 = vmatpush1.msra.mxu0 0.0
    %317 = vmatprep.subr.mxu0 0.0
    %318 = vmatpush1.msra.mxu0 0.0
    %319 = vmatprep.subr.mxu0 0.0
    %320 = vmatpush1.msra.mxu0 0.0
    %321 = vmatprep.subr.mxu0 0.0
    %322 = vmatpush1.msra.mxu0 0.0
    %323 = vmatprep.subr.mxu0 0.0
    %324 = vmatpush1.msra.mxu0 0.0
    %325 = vmatprep.subr.mxu0 0.0
    %326 = vmatpush1.msra.mxu0 0.0
    %327 = vmatprep.subr.mxu0 0.0
    %328 = vmatpush1.msra.mxu0 0.0
    %329 = vmatprep.subr.mxu0 0.0
    %330 = vmatpush1.msra.mxu0 0.0
    %331 = vmatprep.subr.mxu0 0.0
    %332 = vmatpush1.msra.mxu0 0.0
    %333 = vmatprep.subr.mxu0 0.0
    %334 = vmatpush1.msra.mxu0 0.0
    %335 = vmatprep.subr.mxu0 0.0
    %336 = vmatpush1.msra.mxu0 0.0
    %337 = vmatprep.subr.mxu0 0.0
    %338 = vmatpush1.msra.mxu0 0.0
    %339 = vmatprep.subr.mxu0 0.0
    %340 = vmatpush1.msra.mxu0 0.0
    %341 = vmatprep.subr.mxu0 0.0
    %342 = vmatpush1.msra.mxu0 0.0
    %343 = vmatprep.subr.mxu0 0.0
    %344 = vmatpush1.msra.mxu0 0.0
    %345 = vmatprep.subr.mxu0 0.0
    %346 = vmatpush1.msra.mxu0 0.0
    %347 = vmatprep.subr.mxu0 0.0
    %348 = vmatpush1.msra.mxu0 0.0
    %349 = vmatprep.subr.mxu0 0.0
    %350 = vmatpush1.msra.mxu0 0.0
    %351 = vmatprep.mubr.f32.mxu0 0.0
    %v352 = vand.u32 %v49, 4294901760
    %v353 = vsub.f32 %v49, %v352
    %v354 = vand.u32 %v353, 4294901760
    %355 = vmatmul.mubr.f32.gmra.mrb[0].mxu0 %v354
    %v356 = vpop.f32.mrb[0].mxu0
    %v357 = vadd.f32 %v282, %v356
    %v358 = vpop.f32.mrb[0].mxu0
    %359 = vdwg.mxu0
    %360 = vmatprep.subr.mxu0 0.0
    %v361 = vand.u32 %v45, 4294901760
    %v362 = vsub.f32 %v45, %v361
    %v363 = vand.u32 %v362, 4294901760
    %364 = vmatpush1.msra.mxu0 %v363
    %365 = vmatprep.subr.mxu0 0.0
    %v366 = vand.u32 %v46, 4294901760
    %v367 = vsub.f32 %v46, %v366
    %v368 = vand.u32 %v367, 4294901760
    %369 = vmatpush1.msra.mxu0 %v368
    %370 = vmatprep.subr.mxu0 0.0
    %371 = vmatpush1.msra.mxu0 0.0
    %372 = vmatprep.subr.mxu0 0.0
    %373 = vmatpush1.msra.mxu0 0.0
    %374 = vmatprep.subr.mxu0 0.0
    %375 = vmatpush1.msra.mxu0 0.0
    %376 = vmatprep.subr.mxu0 0.0
    %377 = vmatpush1.msra.mxu0 0.0
    %378 = vmatprep.subr.mxu0 0.0
    %379 = vmatpush1.msra.mxu0 0.0
    %380 = vmatprep.subr.mxu0 0.0
    %381 = vmatpush1.msra.mxu0 0.0
    %382 = vmatprep.subr.mxu0 0.0
    %383 = vmatpush1.msra.mxu0 0.0
    %384 = vmatprep.subr.mxu0 0.0
    %385 = vmatpush1.msra.mxu0 0.0
    %386 = vmatprep.subr.mxu0 0.0
    %387 = vmatpush1.msra.mxu0 0.0
    %388 = vmatprep.subr.mxu0 0.0
    %389 = vmatpush1.msra.mxu0 0.0
    %390 = vmatprep.subr.mxu0 0.0
    %391 = vmatpush1.msra.mxu0 0.0
    %392 = vmatprep.subr.mxu0 0.0
    %393 = vmatpush1.msra.mxu0 0.0
    %394 = vmatprep.subr.mxu0 0.0
    %395 = vmatpush1.msra.mxu0 0.0
    %396 = vmatprep.subr.mxu0 0.0
    %397 = vmatpush1.msra.mxu0 0.0
    %398 = vmatprep.subr.mxu0 0.0
    %399 = vmatpush1.msra.mxu0 0.0
    %400 = vmatprep.subr.mxu0 0.0
    %401 = vmatpush1.msra.mxu0 0.0
    %402 = vmatprep.subr.mxu0 0.0
    %403 = vmatpush1.msra.mxu0 0.0
    %404 = vmatprep.subr.mxu0 0.0
    %405 = vmatpush1.msra.mxu0 0.0
    %406 = vmatprep.subr.mxu0 0.0
    %407 = vmatpush1.msra.mxu0 0.0
    %408 = vmatprep.subr.mxu0 0.0
    %409 = vmatpush1.msra.mxu0 0.0
    %410 = vmatprep.subr.mxu0 0.0
    %411 = vmatpush1.msra.mxu0 0.0
    %412 = vmatprep.subr.mxu0 0.0
    %413 = vmatpush1.msra.mxu0 0.0
    %414 = vmatprep.subr.mxu0 0.0
    %415 = vmatpush1.msra.mxu0 0.0
    %416 = vmatprep.subr.mxu0 0.0
    %417 = vmatpush1.msra.mxu0 0.0
    %418 = vmatprep.subr.mxu0 0.0
    %419 = vmatpush1.msra.mxu0 0.0
    %420 = vmatprep.subr.mxu0 0.0
    %421 = vmatpush1.msra.mxu0 0.0
    %422 = vmatprep.subr.mxu0 0.0
    %423 = vmatpush1.msra.mxu0 0.0
    %424 = vmatprep.subr.mxu0 0.0
    %425 = vmatpush1.msra.mxu0 0.0
    %426 = vmatprep.subr.mxu0 0.0
    %427 = vmatpush1.msra.mxu0 0.0
    %428 = vmatprep.subr.mxu0 0.0
    %429 = vmatpush1.msra.mxu0 0.0
    %430 = vmatprep.mubr.f32.mxu0 0.0
    %v431 = vand.u32 %v49, 4294901760
    %432 = vmatmul.mubr.f32.gmra.mrb[0].mxu0 %v431
    %v433 = vpop.f32.mrb[0].mxu0
    %v434 = vadd.f32 %v357, %v433
    %v435 = vpop.f32.mrb[0].mxu0
    %436 = vdwg.mxu0
    %437 = vmatprep.subr.mxu0 0.0
    %v438 = vand.u32 %v45, 4294901760
    %439 = vmatpush1.msra.mxu0 %v438
    %440 = vmatprep.subr.mxu0 0.0
    %v441 = vand.u32 %v46, 4294901760
    %442 = vmatpush1.msra.mxu0 %v441
    %443 = vmatprep.subr.mxu0 0.0
    %444 = vmatpush1.msra.mxu0 0.0
    %445 = vmatprep.subr.mxu0 0.0
    %446 = vmatpush1.msra.mxu0 0.0
    %447 = vmatprep.subr.mxu0 0.0
    %448 = vmatpush1.msra.mxu0 0.0
    %449 = vmatprep.subr.mxu0 0.0
    %450 = vmatpush1.msra.mxu0 0.0
    %451 = vmatprep.subr.mxu0 0.0
    %452 = vmatpush1.msra.mxu0 0.0
    %453 = vmatprep.subr.mxu0 0.0
    %454 = vmatpush1.msra.mxu0 0.0
    %455 = vmatprep.subr.mxu0 0.0
    %456 = vmatpush1.msra.mxu0 0.0
    %457 = vmatprep.subr.mxu0 0.0
    %458 = vmatpush1.msra.mxu0 0.0
    %459 = vmatprep.subr.mxu0 0.0
    %460 = vmatpush1.msra.mxu0 0.0
    %461 = vmatprep.subr.mxu0 0.0
    %462 = vmatpush1.msra.mxu0 0.0
    %463 = vmatprep.subr.mxu0 0.0
    %464 = vmatpush1.msra.mxu0 0.0
    %465 = vmatprep.subr.mxu0 0.0
    %466 = vmatpush1.msra.mxu0 0.0
    %467 = vmatprep.subr.mxu0 0.0
    %468 = vmatpush1.msra.mxu0 0.0
    %469 = vmatprep.subr.mxu0 0.0
    %470 = vmatpush1.msra.mxu0 0.0
    %471 = vmatprep.subr.mxu0 0.0
    %472 = vmatpush1.msra.mxu0 0.0
    %473 = vmatprep.subr.mxu0 0.0
    %474 = vmatpush1.msra.mxu0 0.0
    %475 = vmatprep.subr.mxu0 0.0
    %476 = vmatpush1.msra.mxu0 0.0
    %477 = vmatprep.subr.mxu0 0.0
    %478 = vmatpush1.msra.mxu0 0.0
    %479 = vmatprep.subr.mxu0 0.0
    %480 = vmatpush1.msra.mxu0 0.0
    %481 = vmatprep.subr.mxu0 0.0
    %482 = vmatpush1.msra.mxu0 0.0
    %483 = vmatprep.subr.mxu0 0.0
    %484 = vmatpush1.msra.mxu0 0.0
    %485 = vmatprep.subr.mxu0 0.0
    %486 = vmatpush1.msra.mxu0 0.0
    %487 = vmatprep.subr.mxu0 0.0
    %488 = vmatpush1.msra.mxu0 0.0
    %489 = vmatprep.subr.mxu0 0.0
    %490 = vmatpush1.msra.mxu0 0.0
    %491 = vmatprep.subr.mxu0 0.0
    %492 = vmatpush1.msra.mxu0 0.0
    %493 = vmatprep.subr.mxu0 0.0
    %494 = vmatpush1.msra.mxu0 0.0
    %495 = vmatprep.subr.mxu0 0.0
    %496 = vmatpush1.msra.mxu0 0.0
    %497 = vmatprep.subr.mxu0 0.0
    %498 = vmatpush1.msra.mxu0 0.0
    %499 = vmatprep.subr.mxu0 0.0
    %500 = vmatpush1.msra.mxu0 0.0
    %501 = vmatprep.subr.mxu0 0.0
    %502 = vmatpush1.msra.mxu0 0.0
    %503 = vmatprep.mubr.f32.mxu0 0.0
    %v504 = vand.u32 %v49, 4294901760
    %505 = vmatmul.mubr.f32.gmra.mrb[0].mxu0 %v504
    %v506 = vpop.f32.mrb[0].mxu0
    %v507 = vadd.f32 %v434, %v506
    %v508 = vpop.f32.mrb[0].mxu0
    %509 = vdwg.mxu0
    %510 = vst.msk [vmem:[#allocation5] sm:$0xff] %vm29, %v35
    %512 = vrot.lane.b32.xlu0 %v507, 32
    %v513 = vpop.permute.xlu0 %512
    %vm515 = vcmask 392448
    %516 = vst.msk [vmem:[#allocation5] sm:$0xff] %vm515, %v513
    // Predicated region
    $region18: #{tpu_custom_call.1} parent=1 // pred_check
      _
    $region19: #{tpu_custom_call.1} parent=1 // pred_check_branch
      %518 = sbr.rel (0) target = $region21
    $region20: #{tpu_custom_call.1} parent=1 // pred_region
      %s520 = ssub.s32 128, 128
      %521 = vsyncadd [#allocation4], %s520
      %s523 = sshll.u32 [#allocation5], 4
      %s524 = int_to_ptr.vmem [resolvable:$true] %s523
      %526 = dma.vmem_to_hbm [thread:$0]  %s524, 128, %s3, [#allocation4]
    $region21: #{tpu_custom_call.1} parent=1 // pred_fallthru
      _
    // Predicated region
    $region22: #{tpu_custom_call.1} parent=1 // pred_check
      _
    $region23: #{tpu_custom_call.1} parent=1 // pred_check_branch
      %528 = sbr.rel (0) target = $region25
    $region24: #{tpu_custom_call.1} parent=1 // pred_region
      %529 = dma.done [#allocation4], 128
    $region25: #{tpu_custom_call.1} parent=1 // pred_fallthru
      _
    %530 = vsyncpa [#allocation3], 1
    %531 = vsyncpa [#allocation4], 1

</llo_original>
